<compile_context>
chip_gen: v5e
topology: v5e:2x2
jax: 0.10.0
libtpu: 0.0.40
codegen_flags: <defaults>
</compile_context>

<pallas_src>
import functools
import jax
import jax.numpy as jnp
from jax.experimental import pallas as pl
from jax.experimental.pallas import tpu as pltpu


# ----------------------------------------------------------------------------
# Fused kernel: Linear (MXU) + BatchNorm1d (batch stats) + activation epilogue
# ----------------------------------------------------------------------------
def _dense_block_kernel(x_ref, w_ref, p_ref, o_ref, *,
                        eps, use_bn, add_bias, activation, prelu_alpha):
    """One feature tile.

    x_ref : (N, In)   full-batch activations (BN needs the whole batch)
    w_ref : (In, TN)  weight feature tile (pre-transposed once at init)
    p_ref : (K, TN)   packed per-feature params:
                        use_bn   -> rows [gamma, beta]   (linear bias cancelled by BN)
                        add_bias -> rows [b]
                        else     -> one dummy zero row (unused)
    o_ref : (N, TN)   output tile
    """
    # Linear on the MXU, f32 accumulation (inputs may be bf16).
    z = jnp.dot(x_ref[...], w_ref[...], preferred_element_type=jnp.float32)

    params = p_ref[...]                                   # (K, TN), one small load

    if use_bn:
        # Training-mode BatchNorm1d: per-feature batch mean / biased variance.
        mean = jnp.mean(z, axis=0, keepdims=True)         # XLU cross-sublane reduce
        cen = z - mean
        var = jnp.mean(cen * cen, axis=0, keepdims=True)
        # Fold gamma into the rsqrt: one vmul/elem in the normalize step,
        # rsqrt itself sits on the otherwise-idle EUP slot.
        scale = params[0:1, :] * jax.lax.rsqrt(var + eps)
        z = cen * scale + params[1:2, :]
        # TODO(synk): for very large N, tile the batch on an 'arbitrary' grid axis
        # and accumulate sum / sum-of-squares in VMEM scratch instead of holding
        # the full batch in one block.
    elif add_bias:
        z = z + params[0:1, :]

    if activation == "relu":
        z = jnp.maximum(z, 0.0)
    elif activation == "prelu":
        # TODO(synk): torch nn.PReLU alpha is learnable; fixed default init used here.
        z = jnp.where(z >= 0.0, z, prelu_alpha * z)
    elif activation == "lrelu":
        z = jnp.where(z >= 0.0, z, 0.2 * z)
    elif activation == "tanh":
        z = jnp.tanh(z)
    elif activation == "sigmoid":
        z = jax.nn.sigmoid(z)
    # activation is None -> identity

    o_ref[...] = z.astype(o_ref.dtype)


# ----------------------------------------------------------------------------
# One-time parameter preprocessing (hoisted out of the per-call forward path)
# ----------------------------------------------------------------------------
def prepare_dense_block_params(w_torch, b=None, gamma=None, beta=None, *,
                               norm="batch", bias=True,
                               compute_dtype=jnp.float32):
    """Transpose the torch (Out, In) weight to (In, Out) MXU layout and pack the
    tiny per-feature vectors into one (K, Out) array (one small DMA per step).
    Use compute_dtype=jnp.bfloat16 for full-rate MXU on v6e/v7x at real sizes."""
    out_features = w_torch.shape[0]
    w = jnp.asarray(w_torch, compute_dtype).T                       # (In, Out)
    if norm == "batch":
        # Linear bias is mathematically cancelled by BN's mean subtraction.
        packed = jnp.stack([jnp.asarray(gamma, jnp.float32),
                            jnp.asarray(beta, jnp.float32)], axis=0)  # (2, Out)
    elif bias:
        packed = jnp.asarray(b, jnp.float32).reshape(1, out_features)
    else:
        packed = jnp.zeros((1, out_features), jnp.float32)            # unused
    return w, packed


# ----------------------------------------------------------------------------
# Forward wrapper
# ----------------------------------------------------------------------------
def dense_block_forward(x, w, packed, *, eps=1e-5, norm="batch", bias=True,
                        activation="relu", prelu_alpha=0.25,
                        max_single_tile=512, vmem_limit_bytes=None):
    """x: (N, In). w: (In, Out) pre-transposed. packed: (K, Out) packed params."""
    N, In = x.shape
    In2, Out = w.shape
    assert In == In2
    K = packed.shape[0]

    # Largest lane-dense feature tile: one grid step for small Out (kills the
    # ~0.35us/step fixed overhead), 256-wide tiles (full v6e/v7x MXU width)
    # otherwise, 128 as the v5e-friendly fallback.
    if Out <= max_single_tile:
        tile_n = Out
    elif Out % 256 == 0:
        tile_n = 256
    else:
        assert Out % 128 == 0, "output_size must be a multiple of 128"
        tile_n = 128
    grid = (Out // tile_n,)

    # Only shard feature tiles across TensorCores when there is real work per
    # tile; tiny tiles pay more in launch/sync than they hide.
    per_tile_flops = 2 * N * In * tile_n
    sem = "parallel" if (grid[0] > 1 and per_tile_flops >= (1 << 24)) else "arbitrary"

    x = x.astype(w.dtype)          # bf16 weights => bf16 MXU inputs, f32 accumulate

    kernel = functools.partial(
        _dense_block_kernel, eps=eps, use_bn=(norm == "batch"),
        add_bias=(norm is None and bias), activation=activation,
        prelu_alpha=prelu_alpha)

    return pl.pallas_call(
        kernel,
        out_shape=jax.ShapeDtypeStruct((N, Out), jnp.float32),
        grid_spec=pltpu.PrefetchScalarGridSpec(
            num_scalar_prefetch=0,
            grid=grid,
            in_specs=[
                pl.BlockSpec((N, In), lambda j: (0, 0)),        # full batch, full In
                pl.BlockSpec((In, tile_n), lambda j: (0, j)),   # weight feature tile
                pl.BlockSpec((K, tile_n), lambda j: (0, j)),    # packed gamma/beta (or bias)
            ],
            out_specs=pl.BlockSpec((N, tile_n), lambda j: (0, j)),
        ),
        compiler_params=pltpu.CompilerParams(
            dimension_semantics=(sem,),
            vmem_limit_bytes=vmem_limit_bytes),
    )(x, w, packed)


# ----------------------------------------------------------------------------
# Pure-JAX reference (exact torch training-mode semantics, incl. the bias)
# ----------------------------------------------------------------------------
def _ref_forward(x, w_torch, b, gamma, beta, eps=1e-5):
    z = x @ w_torch.T + b
    mean = jnp.mean(z, axis=0, keepdims=True)
    var = jnp.mean((z - mean) ** 2, axis=0, keepdims=True)      # biased, like torch BN
    y = gamma * (z - mean) / jnp.sqrt(var + eps) + beta
    return jnp.maximum(y, 0.0)                                  # ReLU (module default)


# ----------------------------------------------------------------------------
if __name__ == "__main__":
    key = jax.random.PRNGKey(0)
    kx, kw, kb, kg, kbt = jax.random.split(key, 5)

    N, In, Out = 8, 32, 256                    # small shapes; single-tile grid
    x = jax.random.normal(kx, (N, In), jnp.float32)
    w_torch = 0.1 * jax.random.normal(kw, (Out, In), jnp.float32)   # torch (Out, In)
    b = 0.1 * jax.random.normal(kb, (Out,), jnp.float32)
    gamma = 1.0 + 0.1 * jax.random.normal(kg, (Out,), jnp.float32)
    beta = 0.1 * jax.random.normal(kbt, (Out,), jnp.float32)

    # One-time preprocessing: weight transpose + param packing (not per-forward).
    w, packed = prepare_dense_block_params(w_torch, b, gamma, beta,
                                           norm="batch", bias=True)

    out = jax.block_until_ready(dense_block_forward(x, w, packed))
    assert out.shape == (N, Out), out.shape

    ref = jax.block_until_ready(_ref_forward(x, w_torch, b, gamma, beta))
    err = float(jnp.max(jnp.abs(out - ref)))
    assert err < 5e-3, f"max abs error vs reference: {err}"

    print("KERNEL_OK")
</pallas_src>

<mosaic_0001>
module attributes {stable_mosaic.version = 11 : i64} {
  func.func @_dense_block_kernel(%arg0: i32, %arg1: memref<8x32xf32, #tpu.memory_space<vmem>>, %arg2: memref<32x256xf32, #tpu.memory_space<vmem>>, %arg3: memref<2x256xf32, #tpu.memory_space<vmem>>, %arg4: memref<8x256xf32, #tpu.memory_space<vmem>>) attributes {dimension_semantics = [#tpu.dimension_semantics<arbitrary>], iteration_bounds = array<i64: 1>, scalar_prefetch = 0 : i64, scratch_operands = 0 : i64, tpu.core_type = #tpu.core_type<tc>, window_params = [{pipeline_mode = #tpu.pipeline_mode<synchronous>, transform_indices = @transform_0, window_bounds = array<i64: 8, 32>}, {transform_indices = @transform_1, window_bounds = array<i64: 32, 256>}, {transform_indices = @transform_2, window_bounds = array<i64: 2, 256>}, {transform_indices = @transform_3, window_bounds = array<i64: 8, 256>}]} {
    %c0 = arith.constant 0 : index
    %c0_0 = arith.constant 0 : index
    %0 = vector.load %arg1[%c0, %c0_0] : memref<8x32xf32, #tpu.memory_space<vmem>>, vector<8x32xf32>
    %c0_1 = arith.constant 0 : index
    %c0_2 = arith.constant 0 : index
    %1 = vector.load %arg2[%c0_1, %c0_2] : memref<32x256xf32, #tpu.memory_space<vmem>>, vector<32x256xf32>
    %cst = arith.constant dense<0.000000e+00> : vector<8x256xf32>
    %2 = tpu.matmul %0, %1, %cst {dimension_numbers = #tpu.dot_dimension_numbers<[1], [0], [0], [1], [0, 0, 1, 1], [], []>} : vector<8x32xf32>, vector<32x256xf32>, vector<8x256xf32> -> vector<8x256xf32>
    %c0_3 = arith.constant 0 : index
    %c0_4 = arith.constant 0 : index
    %3 = vector.load %arg3[%c0_3, %c0_4] : memref<2x256xf32, #tpu.memory_space<vmem>>, vector<2x256xf32>
    %cst_5 = arith.constant dense<0.000000e+00> : vector<256xf32>
    %4 = vector.multi_reduction <add>, %2, %cst_5 [0] : vector<8x256xf32> to vector<256xf32>
    %5 = vector.shape_cast %4 : vector<256xf32> to vector<1x256xf32>
    %cst_6 = arith.constant 8.000000e+00 : f32
    %6 = vector.broadcast %cst_6 : f32 to vector<1x256xf32>
    %7 = arith.divf %5, %6 : vector<1x256xf32>
    %8 = vector.broadcast %7 : vector<1x256xf32> to vector<8x256xf32>
    %9 = arith.subf %2, %8 : vector<8x256xf32>
    %10 = arith.mulf %9, %9 : vector<8x256xf32>
    %cst_7 = arith.constant dense<0.000000e+00> : vector<256xf32>
    %11 = vector.multi_reduction <add>, %10, %cst_7 [0] : vector<8x256xf32> to vector<256xf32>
    %12 = vector.shape_cast %11 : vector<256xf32> to vector<1x256xf32>
    %cst_8 = arith.constant 8.000000e+00 : f32
    %13 = vector.broadcast %cst_8 : f32 to vector<1x256xf32>
    %14 = arith.divf %12, %13 : vector<1x256xf32>
    %15 = vector.extract_strided_slice %3 {offsets = [0, 0], sizes = [1, 256], strides = [1, 1]} : vector<2x256xf32> to vector<1x256xf32>
    %cst_9 = arith.constant 9.99999974E-6 : f32
    %16 = vector.broadcast %cst_9 : f32 to vector<1x256xf32>
    %17 = arith.addf %14, %16 : vector<1x256xf32>
    %18 = math.rsqrt %17 : vector<1x256xf32>
    %19 = arith.mulf %15, %18 : vector<1x256xf32>
    %20 = vector.broadcast %19 : vector<1x256xf32> to vector<8x256xf32>
    %21 = arith.mulf %9, %20 : vector<8x256xf32>
    %22 = vector.extract_strided_slice %3 {offsets = [1, 0], sizes = [1, 256], strides = [1, 1]} : vector<2x256xf32> to vector<1x256xf32>
    %23 = vector.broadcast %22 : vector<1x256xf32> to vector<8x256xf32>
    %24 = arith.addf %21, %23 : vector<8x256xf32>
    %cst_10 = arith.constant 0.000000e+00 : f32
    %25 = vector.broadcast %cst_10 : f32 to vector<8x256xf32>
    %26 = arith.maximumf %24, %25 : vector<8x256xf32>
    %c0_11 = arith.constant 0 : index
    %c0_12 = arith.constant 0 : index
    %27 = vector.load %arg4[%c0_11, %c0_12] : memref<8x256xf32, #tpu.memory_space<vmem>>, vector<8x256xf32>
    tpu.vector_store %arg4[%c0_11, %c0_12], %26 {strides = array<i32>} : memref<8x256xf32, #tpu.memory_space<vmem>>, vector<8x256xf32>,
    return
  }
  func.func @transform_0(%arg0: i32) -> (i32, i32) {
    %c0_i32 = arith.constant 0 : i32
    %c0_i32_0 = arith.constant 0 : i32
    %c0_i32_1 = arith.constant 0 : i32
    return %c0_i32, %c0_i32_0 : i32, i32
  }
  func.func @transform_1(%arg0: i32) -> (i32, i32) {
    %c0_i32 = arith.constant 0 : i32
    %c0_i32_0 = arith.constant 0 : i32
    return %c0_i32, %arg0 : i32, i32
  }
  func.func @transform_2(%arg0: i32) -> (i32, i32) {
    %c0_i32 = arith.constant 0 : i32
    %c0_i32_0 = arith.constant 0 : i32
    return %c0_i32, %arg0 : i32, i32
  }
  func.func @transform_3(%arg0: i32) -> (i32, i32) {
    %c0_i32 = arith.constant 0 : i32
    %c0_i32_0 = arith.constant 0 : i32
    return %c0_i32, %arg0 : i32, i32
  }
}

</mosaic_0001>

<llo_original>
// kernel: tpu_custom_call.1
$region0: #{tpu_custom_call.1}
  #allocation0 [shape = 'u32[]', space=smem, size = 0x4, offset = 0x4, fixed_abs, tag = 'smem constant byte address 0x4 - core index']
  #allocation1 [shape = 'u32[72,128]{1,0:T(1,128)}', space=vmem, size = 0x9000, scoped, tag = 'internal scratch']
  %s0 = inlined_call_operand.hbm [shape: f32[8,32], index: 0, kind: input, shape index: {}]
  %s1 = inlined_call_operand.hbm [shape: f32[32,256], index: 1, kind: input, shape index: {}]
  %s2 = inlined_call_operand.hbm [shape: f32[2,256], index: 2, kind: input, shape index: {}]
  %s3 = inlined_call_operand.hbm [shape: f32[8,256], index: 3, kind: output, shape index: {}]
  %s4 = sld [smem:[#allocation0]]
  $region34: #{tpu_custom_call.1} parent=0
    _
  %s6 = ssub.s32 1, %s4
  %s7 = scalar_select 0, %s6, %s4
  $region1: #{tpu_custom_call.1} parent=0
    #allocation2 [shape = 'u8[4096]{0}', space=vmem, size = 0x1000, scoped, tag = 'input window, operand 0, single buffered']
    #allocation3 [shape = 's32[1]{0}', space=sflag, size = 0x4, scoped, tag = 'scoped memory for tpu_custom_call.1']
    #allocation4 [shape = 's32[1]{0}', space=sflag, size = 0x4, scoped, tag = 'scoped memory for tpu_custom_call.1']
    #allocation5 [shape = 'u8[32768]{0}', space=vmem, size = 0x8000, scoped, tag = 'input window, operand 1, single buffered']
    #allocation6 [shape = 's32[1]{0}', space=sflag, size = 0x4, scoped, tag = 'scoped memory for tpu_custom_call.1']
    #allocation7 [shape = 'u8[2048]{0}', space=vmem, size = 0x800, scoped, tag = 'input window, operand 2, single buffered']
    #allocation8 [shape = 'u8[8192]{0}', space=vmem, size = 0x2000, scoped, tag = 'output window, operand 0, single buffered']
    %8 = vsyncpa [#allocation3], 0
    %9 = vsyncpa [#allocation6], 0
    %10 = vsyncpa [#allocation4], 0
    // Predicated region
    $region2: #{tpu_custom_call.1} parent=1 // pred_check
      _
    $region3: #{tpu_custom_call.1} parent=1 // pred_check_branch
      %12 = sbr.rel (0) target = $region5
    $region4: #{tpu_custom_call.1} parent=1 // pred_region
      %14 = vsyncadd [#allocation3], 0
      %s16 = sshll.u32 %s0, 4
      %s17 = int_to_ptr.hbm [resolvable:$true] %s16
      %s18 = sshll.u32 [#allocation2], 4
      %s19 = int_to_ptr.vmem [resolvable:$true] %s18
      %21 = dma.hbm_to_vmem [thread:$0]  %s17, 128, %s19, [#allocation3]
    $region5: #{tpu_custom_call.1} parent=1 // pred_fallthru
      _
    // Predicated region
    $region6: #{tpu_custom_call.1} parent=1 // pred_check
      _
    $region7: #{tpu_custom_call.1} parent=1 // pred_check_branch
      %23 = sbr.rel (0) target = $region9
    $region8: #{tpu_custom_call.1} parent=1 // pred_region
      %25 = vsyncadd [#allocation6], 0
      %s26 = sshll.u32 %s1, 4
      %s27 = int_to_ptr.hbm [resolvable:$true] %s26
      %s28 = sshll.u32 [#allocation5], 4
      %s29 = int_to_ptr.vmem [resolvable:$true] %s28
      %34 = dma.hbm_to_vmem [thread:$0]  %s27, 1024, %s29, [#allocation6], 256, 256, 16
    $region9: #{tpu_custom_call.1} parent=1 // pred_fallthru
      _
    // Predicated region
    $region10: #{tpu_custom_call.1} parent=1 // pred_check
      _
    $region11: #{tpu_custom_call.1} parent=1 // pred_check_branch
      %36 = sbr.rel (0) target = $region13
    $region12: #{tpu_custom_call.1} parent=1 // pred_region
      %38 = vsyncadd [#allocation6], 0
      %s40 = sshll.u32 %s2, 4
      %s41 = int_to_ptr.hbm [resolvable:$true] %s40
      %s42 = sshll.u32 [#allocation7], 4
      %s43 = int_to_ptr.vmem [resolvable:$true] %s42
      %45 = dma.hbm_to_vmem [thread:$0]  %s41, 64, %s43, [#allocation6]
    $region13: #{tpu_custom_call.1} parent=1 // pred_fallthru
      _
    // Predicated region
    $region14: #{tpu_custom_call.1} parent=1 // pred_check
      _
    $region15: #{tpu_custom_call.1} parent=1 // pred_check_branch
      %47 = sbr.rel (0) target = $region17
    $region16: #{tpu_custom_call.1} parent=1 // pred_region
      %49 = dma.done [#allocation3], 128
    $region17: #{tpu_custom_call.1} parent=1 // pred_fallthru
      _
    // Predicated region
    $region18: #{tpu_custom_call.1} parent=1 // pred_check
      _
    $region19: #{tpu_custom_call.1} parent=1 // pred_check_branch
      %51 = sbr.rel (0) target = $region21
    $region20: #{tpu_custom_call.1} parent=1 // pred_region
      %53 = dma.done [#allocation6], 1024
    $region21: #{tpu_custom_call.1} parent=1 // pred_fallthru
      _
    // Predicated region
    $region22: #{tpu_custom_call.1} parent=1 // pred_check
      _
    $region23: #{tpu_custom_call.1} parent=1 // pred_check_branch
      %55 = sbr.rel (0) target = $region25
    $region24: #{tpu_custom_call.1} parent=1 // pred_region
      %57 = dma.done [#allocation6], 64
    $region25: #{tpu_custom_call.1} parent=1 // pred_fallthru
      _
    %v58 = vld [vmem:[#allocation2] sm:$0xff]
    %v59 = vld [vmem:[#allocation5] sm:$0xff]
    %v60 = vld [vmem:[#allocation5 + $0x8] sm:$0xff]
    %v61 = vld [vmem:[#allocation5 + $0x10] sm:$0xff]
    %v62 = vld [vmem:[#allocation5 + $0x18] sm:$0xff]
    %v63 = vld [vmem:[#allocation5 + $0x20] sm:$0xff]
    %v64 = vld [vmem:[#allocation5 + $0x28] sm:$0xff]
    %v65 = vld [vmem:[#allocation5 + $0x30] sm:$0xff]
    %v66 = vld [vmem:[#allocation5 + $0x38] sm:$0xff]
    %vm67 = vcmask 261120
    %v69 = vsel %vm67, %v58, 0
    %71 = vmatpush.msra.mxu0 0.0
    %72 = vmatpush.msra.mxu0 0.0
    %73 = vmatpush.msra.mxu0 0.0
    %74 = vmatpush.msra.mxu0 0.0
    %75 = vmatpush.msra.mxu0 0.0
    %76 = vmatpush.msra.mxu0 0.0
    %77 = vmatpush.msra.mxu0 0.0
    %78 = vmatpush.msra.mxu0 0.0
    %79 = vmatpush.msra.mxu0 0.0
    %80 = vmatpush.msra.mxu0 0.0
    %81 = vmatpush.msra.mxu0 0.0
    %82 = vmatpush.msra.mxu0 0.0
    %83 = vmatpush.msra.mxu0 %v65
    %84 = vmatpush.msra.mxu0 %v63
    %85 = vmatpush.msra.mxu0 %v61
    %86 = vmatpush.msra.mxu0 %v59
    %87 = vmatmul.f32.gmra.mxu0 %v69
    %v88 = vpop.f32.mrf.mxu0
    %v89 = vadd.f32 0.0, %v88
    %90 = vdwg.mxu0
    %91 = vmatpush.msra.mxu0 0.0
    %92 = vmatpush.msra.mxu0 0.0
    %93 = vmatpush.msra.mxu0 0.0
    %94 = vmatpush.msra.mxu0 0.0
    %95 = vmatpush.msra.mxu0 0.0
    %96 = vmatpush.msra.mxu0 0.0
    %97 = vmatpush.msra.mxu0 0.0
    %98 = vmatpush.msra.mxu0 0.0
    %99 = vmatpush.msra.mxu0 0.0
    %100 = vmatpush.msra.mxu0 0.0
    %101 = vmatpush.msra.mxu0 0.0
    %102 = vmatpush.msra.mxu0 0.0
    %103 = vmatpush.msra.mxu0 %v66
    %104 = vmatpush.msra.mxu0 %v64
    %105 = vmatpush.msra.mxu0 %v62
    %106 = vmatpush.msra.mxu0 %v60
    %107 = vmatmul.f32.gmra.mxu0 %v69
    %v108 = vpop.f32.mrf.mxu0
    %v109 = vadd.f32 0.0, %v108
    %110 = vdwg.mxu0
    %v111 = vld [vmem:[#allocation7] sm:$0xf]
    %v112 = vrot.slane %v89, 4
    %v113 = vadd.f32 %v89, %v112
    %v114 = vrot.slane %v113, 2
    %v115 = vadd.f32 %v113, %v114
    %v116 = vrot.slane %v115, 1
    %v117 = vadd.f32 %v115, %v116
    %v118 = vrot.slane %v109, 4
    %v119 = vadd.f32 %v109, %v118
    %v120 = vrot.slane %v119, 2
    %v121 = vadd.f32 %v119, %v120
    %v122 = vrot.slane %v121, 1
    %v123 = vadd.f32 %v121, %v122
    %v124 = vrcp.pop 8.0
    %v125 = vmul.f32 8.0, %v124
    %v126 = vsub.f32 1.0, %v125
    %v127 = vmul.f32 %v124, %v126
    %v128 = vadd.f32 %v124, %v127
    %vm129 = vweird.f32 %v124
    %v130 = vsel %vm129, %v124, %v128
    %v131 = vmul.f32 %v117, %v130
    %v132 = vmul.f32 %v123, %v130
    %v133 = vsub.f32 %v89, %v131
    %v134 = vsub.f32 %v109, %v132
    %v135 = vmul.f32 %v133, %v133
    %v136 = vmul.f32 %v134, %v134
    %v137 = vrot.slane %v135, 4
    %v138 = vadd.f32 %v135, %v137
    %v139 = vrot.slane %v138, 2
    %v140 = vadd.f32 %v138, %v139
    %v141 = vrot.slane %v140, 1
    %v142 = vadd.f32 %v140, %v141
    %v143 = vrot.slane %v136, 4
    %v144 = vadd.f32 %v136, %v143
    %v145 = vrot.slane %v144, 2
    %v146 = vadd.f32 %v144, %v145
    %v147 = vrot.slane %v146, 1
    %v148 = vadd.f32 %v146, %v147
    %v149 = vmul.f32 %v142, %v130
    %v150 = vmul.f32 %v148, %v130
    %v151 = vadd.f32 %v149, 1e-05
    %v152 = vadd.f32 %v150, 1e-05
    %v153 = vrsqrt.pop %v151
    %v154 = vmul.f32 %v153, %v151
    %v155 = vmul.f32 %v154, %v153
    %v156 = vmul.f32 0.5, %v155
    %v157 = vsub.f32 1.5, %v156
    %v158 = vmul.f32 %v153, %v157
    %vm159 = vweird.f32 %v151
    %vm160 = vweird.f32 %v153
    %vm161 = vmor %vm159, %vm160
    %v162 = vsel %vm161, %v153, %v158
    %v163 = vrsqrt.pop %v152
    %v164 = vmul.f32 %v163, %v152
    %v165 = vmul.f32 %v164, %v163
    %v166 = vmul.f32 0.5, %v165
    %v167 = vsub.f32 1.5, %v166
    %v168 = vmul.f32 %v163, %v167
    %vm169 = vweird.f32 %v152
    %vm170 = vweird.f32 %v163
    %vm171 = vmor %vm169, %vm170
    %v172 = vsel %vm171, %v163, %v168
    %v175 = vrot.slane %v172, 6
    %vm176 = vcmask 1041408
    %v177 = vsel %vm176, %v162, %v175
    %v179 = vmul.f32 %v111, %v177
    %v181 = vperm.slane %v179, 0
    %v182 = vperm.slane %v179, 2
    %v185 = vperm.slane %v181, 0
    %v186 = vperm.slane %v182, 0
    %v187 = vmul.f32 %v133, %v185
    %v188 = vmul.f32 %v134, %v186
    %v190 = vperm.slane %v111, 1
    %v191 = vperm.slane %v111, 3
    %v194 = vperm.slane %v190, 1
    %v195 = vperm.slane %v191, 1
    %v196 = vadd.f32 %v187, %v194
    %v197 = vadd.f32 %v188, %v195
    %v198 = vmax.f32 %v196, 0.0
    %v199 = vmax.f32 %v197, 0.0
    %200 = vst [vmem:[#allocation8] sm:$0xff] %v198
    %201 = vst [vmem:[#allocation8 + $0x8] sm:$0xff] %v199
    // Predicated region
    $region26: #{tpu_custom_call.1} parent=1 // pred_check
      _
    $region27: #{tpu_custom_call.1} parent=1 // pred_check_branch
      %203 = sbr.rel (0) target = $region29
    $region28: #{tpu_custom_call.1} parent=1 // pred_region
      %205 = vsyncadd [#allocation4], 0
      %s207 = sshll.u32 [#allocation8], 4
      %s208 = int_to_ptr.vmem [resolvable:$true] %s207
      %s209 = sshll.u32 %s3, 4
      %s210 = int_to_ptr.hbm [resolvable:$true] %s209
      %212 = dma.vmem_to_hbm [thread:$0]  %s208, 256, %s210, [#allocation4]
    $region29: #{tpu_custom_call.1} parent=1 // pred_fallthru
      _
    // Predicated region
    $region30: #{tpu_custom_call.1} parent=1 // pred_check
      _
    $region31: #{tpu_custom_call.1} parent=1 // pred_check_branch
      %214 = sbr.rel (0) target = $region33
    $region32: #{tpu_custom_call.1} parent=1 // pred_region
      %216 = dma.done [#allocation4], 256
    $region33: #{tpu_custom_call.1} parent=1 // pred_fallthru
      _
    %217 = vsyncpa [#allocation3], 1
    %218 = vsyncpa [#allocation6], 1
    %219 = vsyncpa [#allocation4], 1

</llo_original>
